<compile_context>
chip_gen: v6e
topology: v6e:2x2x1
jax: 0.10.0
libtpu: 0.0.40
codegen_flags: <defaults>
</compile_context>

<pallas_src>
import functools

import numpy as np
import jax
import jax.numpy as jnp
from jax.experimental import pallas as pl
from jax.experimental.pallas import tpu as pltpu


def _initial_block_kernel(x_ref, t_ref, b_ref, o_ref, *, H, W, Cin, Cout, KH,
                          pad_h):
    """One grid step = one image.

    x_ref: (H, W*Cin)               image rows, lane dim = W*Cin
    t_ref: (KH, W*Cin, W*Cout)      block-Toeplitz weights (BN scale folded in)
    b_ref: (1, W*Cout)              folded bias ((conv_b - mean)*scale + beta), tiled over W
    o_ref: (H, W*Cout)              lane-dense output (W*Cout is a multiple of 128 here)
    """
    # Vertical halo: pad `pad_h` zero rows above and below (horizontal padding
    # is already baked into t_ref as zero Toeplitz blocks).
    zeros_halo = jnp.zeros((pad_h, W * Cin), jnp.float32)
    xp = jnp.concatenate([zeros_halo, x_ref[...].astype(jnp.float32),
                          zeros_halo], axis=0)            # (H + 2*pad_h, W*Cin)

    # Register-resident f32 accumulator, initialized from the first tap.
    # Static Python unroll over the KH taps: each tap is one MXU matmul
    # (H, W*Cin) @ (W*Cin, W*Cout) with a statically-sliced weight block.
    acc = jnp.dot(xp[0:H, :], t_ref[0], preferred_element_type=jnp.float32)
    for kh in range(1, KH):
        acc = acc + jnp.dot(xp[kh:kh + H, :], t_ref[kh],
                            preferred_element_type=jnp.float32)

    # Fused (folded) BatchNorm bias + ReLU epilogue; single lane-dense store.
    o_ref[...] = jnp.maximum(acc + b_ref[...], 0.0).astype(o_ref.dtype)


def initial_block_forward(x_nchw, conv_w, conv_b, gamma, beta,
                          running_mean, running_var, eps=1e-5):
    """x_nchw: (N, Cin, H, W); conv_w: (Cout, Cin, KH, KW) (PyTorch layouts)."""
    N, Cin, H, W = x_nchw.shape
    Cout, _, KH, KW = conv_w.shape
    pad_h = (KH - 1) // 2
    pad_w = (KW - 1) // 2

    # NCHW -> (N, H, W*Cin): rows in H, lane dim = W*Cin.  (Boundary transposes
    # are required only because the interface is NCHW; a real model would stay
    # NHWC end-to-end.)
    x_rows = jnp.transpose(x_nchw, (0, 2, 3, 1)).reshape(N, H, W * Cin)
    x_rows = x_rows.astype(jnp.float32)

    # Fold BatchNorm (inference) into per-channel scale/bias; scale goes into
    # the weights, bias stays as an epilogue add.
    bn_scale = gamma / jnp.sqrt(running_var + eps)                 # (Cout,)
    bn_bias = (conv_b - running_mean) * bn_scale + beta            # (Cout,)

    # (Cout, Cin, KH, KW) -> (KH, KW, Cin, Cout), BN scale folded in.
    wk = jnp.transpose(conv_w, (2, 3, 1, 0)).astype(jnp.float32)
    wk = wk * bn_scale[None, None, None, :]

    # Block-Toeplitz weights T[kh] : (W*Cin, W*Cout)
    #   T[kh, w_in*Cin+ci, w_out*Cout+co] = wk[kh, kw, ci, co],  kw = w_in - w_out + pad_w
    # (zero where kw is out of range => horizontal zero padding is implicit).
    w_in_idx = np.arange(W)[:, None]                    # (W, 1)
    w_out_idx = np.arange(W)[None, :]                   # (1, W)
    kw_mat = w_in_idx - w_out_idx + pad_w               # (W, W)
    valid = (kw_mat >= 0) & (kw_mat < KW)
    kw_clip = np.clip(kw_mat, 0, KW - 1)                # static numpy indices
    G = wk[:, kw_clip, :, :]                            # (KH, W_in, W_out, Cin, Cout)
    G = G * jnp.asarray(valid, jnp.float32)[None, :, :, None, None]
    T = jnp.transpose(G, (0, 1, 3, 2, 4)).reshape(KH, W * Cin, W * Cout)

    # Bias laid out to match the (w*Cout + co) output columns.
    bias_flat = jnp.tile(bn_bias, W).reshape(1, W * Cout).astype(jnp.float32)

    kernel = functools.partial(_initial_block_kernel,
                               H=H, W=W, Cin=Cin, Cout=Cout, KH=KH, pad_h=pad_h)

    out_flat = pl.pallas_call(
        kernel,
        out_shape=jax.ShapeDtypeStruct((N, H, W * Cout), jnp.float32),
        grid_spec=pltpu.PrefetchScalarGridSpec(
            num_scalar_prefetch=0,
            grid=(N,),
            in_specs=[
                # Batch dim squeezed (None) -> 2-D refs in the kernel.
                pl.BlockSpec((None, H, W * Cin), lambda n: (n, 0, 0)),
                # Constant index_map -> weights stay resident across grid steps.
                pl.BlockSpec((KH, W * Cin, W * Cout), lambda n: (0, 0, 0)),
                pl.BlockSpec((1, W * Cout), lambda n: (0, 0)),
            ],
            out_specs=pl.BlockSpec((None, H, W * Cout), lambda n: (n, 0, 0)),
        ),
        compiler_params=pltpu.CompilerParams(
            dimension_semantics=("parallel",),
            vmem_limit_bytes=32 * 1024 * 1024,
        ),
    )(x_rows, T, bias_flat)

    # (N, H, W*Cout) -> NCHW to match the PyTorch output convention.
    out_nhwc = out_flat.reshape(N, H, W, Cout)
    return jnp.transpose(out_nhwc, (0, 3, 1, 2)).astype(x_nchw.dtype)


def _reference_forward(x_nchw, conv_w, conv_b, gamma, beta,
                       running_mean, running_var, eps=1e-5):
    y = jax.lax.conv_general_dilated(
        x_nchw, conv_w, window_strides=(1, 1), padding="SAME",
        dimension_numbers=("NCHW", "OIHW", "NCHW"))
    y = y + conv_b[None, :, None, None]
    scale = gamma / jnp.sqrt(running_var + eps)
    y = (y - running_mean[None, :, None, None]) * scale[None, :, None, None] \
        + beta[None, :, None, None]
    return jnp.maximum(y, 0.0)


if __name__ == "__main__":
    # Small shapes consistent with the module: batch=2, Cin=4, Cout=8, 16x16, k=7.
    N, Cin, Cout, H, W, K = 2, 4, 8, 16, 16, 7

    key = jax.random.PRNGKey(0)
    kx, kw, kb, kg, kbeta, km, kv = jax.random.split(key, 7)

    x = jax.random.normal(kx, (N, Cin, H, W), dtype=jnp.float32)
    conv_w = jax.random.normal(kw, (Cout, Cin, K, K), dtype=jnp.float32) * 0.05
    conv_b = jax.random.normal(kb, (Cout,), dtype=jnp.float32) * 0.1
    gamma = 1.0 + 0.1 * jax.random.normal(kg, (Cout,), dtype=jnp.float32)
    beta = 0.1 * jax.random.normal(kbeta, (Cout,), dtype=jnp.float32)
    running_mean = 0.1 * jax.random.normal(km, (Cout,), dtype=jnp.float32)
    running_var = jnp.abs(1.0 + 0.1 * jax.random.normal(kv, (Cout,),
                                                        dtype=jnp.float32))

    out = initial_block_forward(x, conv_w, conv_b, gamma, beta,
                                running_mean, running_var)
    out = jax.block_until_ready(out)

    ref = _reference_forward(x, conv_w, conv_b, gamma, beta,
                             running_mean, running_var)
    assert out.shape == (N, Cout, H, W)
    assert jnp.max(jnp.abs(out - ref)) < 1e-4

    print("KERNEL_OK")
</pallas_src>

<mosaic_0001>
module attributes {stable_mosaic.version = 11 : i64} {
  func.func @_initial_block_kernel(%arg0: i32, %arg1: memref<1x16x64xf32, #tpu.memory_space<vmem>>, %arg2: memref<7x64x128xf32, #tpu.memory_space<vmem>>, %arg3: memref<1x128xf32, #tpu.memory_space<vmem>>, %arg4: memref<1x16x128xf32, #tpu.memory_space<vmem>>) attributes {dimension_semantics = [#tpu.dimension_semantics<parallel>], iteration_bounds = array<i64: 2>, scalar_prefetch = 0 : i64, scratch_operands = 0 : i64, tpu.core_type = #tpu.core_type<tc>, window_params = [{transform_indices = @transform_0, window_bounds = array<i64: 1, 16, 64>}, {pipeline_mode = #tpu.pipeline_mode<synchronous>, transform_indices = @transform_1, window_bounds = array<i64: 7, 64, 128>}, {pipeline_mode = #tpu.pipeline_mode<synchronous>, transform_indices = @transform_2, window_bounds = array<i64: 1, 128>}, {transform_indices = @transform_3, window_bounds = array<i64: 1, 16, 128>}]} {
    %cst = arith.constant 0.000000e+00 : f32
    %0 = vector.broadcast %cst : f32 to vector<3x64xf32>
    %c0 = arith.constant 0 : index
    %c0_0 = arith.constant 0 : index
    %c0_1 = arith.constant 0 : index
    %1 = vector.load %arg1[%c0, %c0_0, %c0_1] : memref<1x16x64xf32, #tpu.memory_space<vmem>>, vector<1x16x64xf32>
    %2 = vector.shape_cast %1 : vector<1x16x64xf32> to vector<16x64xf32>
    %3 = tpu.concatenate %0, %2, %0 in 0 : vector<3x64xf32>, vector<16x64xf32>, vector<3x64xf32> -> vector<22x64xf32>
    %4 = vector.extract_strided_slice %3 {offsets = [0, 0], sizes = [16, 64], strides = [1, 1]} : vector<22x64xf32> to vector<16x64xf32>
    %c0_2 = arith.constant 0 : index
    %c0_3 = arith.constant 0 : index
    %c0_4 = arith.constant 0 : index
    %5 = vector.load %arg2[%c0_2, %c0_3, %c0_4] : memref<7x64x128xf32, #tpu.memory_space<vmem>>, vector<1x64x128xf32>
    %6 = vector.shape_cast %5 : vector<1x64x128xf32> to vector<64x128xf32>
    %cst_5 = arith.constant dense<0.000000e+00> : vector<16x128xf32>
    %7 = tpu.matmul %4, %6, %cst_5 {dimension_numbers = #tpu.dot_dimension_numbers<[1], [0], [0], [1], [0, 0, 1, 1], [], []>} : vector<16x64xf32>, vector<64x128xf32>, vector<16x128xf32> -> vector<16x128xf32>
    %8 = vector.extract_strided_slice %3 {offsets = [1, 0], sizes = [16, 64], strides = [1, 1]} : vector<22x64xf32> to vector<16x64xf32>
    %c1 = arith.constant 1 : index
    %c0_6 = arith.constant 0 : index
    %c0_7 = arith.constant 0 : index
    %9 = vector.load %arg2[%c1, %c0_6, %c0_7] : memref<7x64x128xf32, #tpu.memory_space<vmem>>, vector<1x64x128xf32>
    %10 = vector.shape_cast %9 : vector<1x64x128xf32> to vector<64x128xf32>
    %cst_8 = arith.constant dense<0.000000e+00> : vector<16x128xf32>
    %11 = tpu.matmul %8, %10, %cst_8 {dimension_numbers = #tpu.dot_dimension_numbers<[1], [0], [0], [1], [0, 0, 1, 1], [], []>} : vector<16x64xf32>, vector<64x128xf32>, vector<16x128xf32> -> vector<16x128xf32>
    %12 = arith.addf %7, %11 : vector<16x128xf32>
    %13 = vector.extract_strided_slice %3 {offsets = [2, 0], sizes = [16, 64], strides = [1, 1]} : vector<22x64xf32> to vector<16x64xf32>
    %c2 = arith.constant 2 : index
    %c0_9 = arith.constant 0 : index
    %c0_10 = arith.constant 0 : index
    %14 = vector.load %arg2[%c2, %c0_9, %c0_10] : memref<7x64x128xf32, #tpu.memory_space<vmem>>, vector<1x64x128xf32>
    %15 = vector.shape_cast %14 : vector<1x64x128xf32> to vector<64x128xf32>
    %cst_11 = arith.constant dense<0.000000e+00> : vector<16x128xf32>
    %16 = tpu.matmul %13, %15, %cst_11 {dimension_numbers = #tpu.dot_dimension_numbers<[1], [0], [0], [1], [0, 0, 1, 1], [], []>} : vector<16x64xf32>, vector<64x128xf32>, vector<16x128xf32> -> vector<16x128xf32>
    %17 = arith.addf %12, %16 : vector<16x128xf32>
    %18 = vector.extract_strided_slice %3 {offsets = [3, 0], sizes = [16, 64], strides = [1, 1]} : vector<22x64xf32> to vector<16x64xf32>
    %c3 = arith.constant 3 : index
    %c0_12 = arith.constant 0 : index
    %c0_13 = arith.constant 0 : index
    %19 = vector.load %arg2[%c3, %c0_12, %c0_13] : memref<7x64x128xf32, #tpu.memory_space<vmem>>, vector<1x64x128xf32>
    %20 = vector.shape_cast %19 : vector<1x64x128xf32> to vector<64x128xf32>
    %cst_14 = arith.constant dense<0.000000e+00> : vector<16x128xf32>
    %21 = tpu.matmul %18, %20, %cst_14 {dimension_numbers = #tpu.dot_dimension_numbers<[1], [0], [0], [1], [0, 0, 1, 1], [], []>} : vector<16x64xf32>, vector<64x128xf32>, vector<16x128xf32> -> vector<16x128xf32>
    %22 = arith.addf %17, %21 : vector<16x128xf32>
    %23 = vector.extract_strided_slice %3 {offsets = [4, 0], sizes = [16, 64], strides = [1, 1]} : vector<22x64xf32> to vector<16x64xf32>
    %c4 = arith.constant 4 : index
    %c0_15 = arith.constant 0 : index
    %c0_16 = arith.constant 0 : index
    %24 = vector.load %arg2[%c4, %c0_15, %c0_16] : memref<7x64x128xf32, #tpu.memory_space<vmem>>, vector<1x64x128xf32>
    %25 = vector.shape_cast %24 : vector<1x64x128xf32> to vector<64x128xf32>
    %cst_17 = arith.constant dense<0.000000e+00> : vector<16x128xf32>
    %26 = tpu.matmul %23, %25, %cst_17 {dimension_numbers = #tpu.dot_dimension_numbers<[1], [0], [0], [1], [0, 0, 1, 1], [], []>} : vector<16x64xf32>, vector<64x128xf32>, vector<16x128xf32> -> vector<16x128xf32>
    %27 = arith.addf %22, %26 : vector<16x128xf32>
    %28 = vector.extract_strided_slice %3 {offsets = [5, 0], sizes = [16, 64], strides = [1, 1]} : vector<22x64xf32> to vector<16x64xf32>
    %c5 = arith.constant 5 : index
    %c0_18 = arith.constant 0 : index
    %c0_19 = arith.constant 0 : index
    %29 = vector.load %arg2[%c5, %c0_18, %c0_19] : memref<7x64x128xf32, #tpu.memory_space<vmem>>, vector<1x64x128xf32>
    %30 = vector.shape_cast %29 : vector<1x64x128xf32> to vector<64x128xf32>
    %cst_20 = arith.constant dense<0.000000e+00> : vector<16x128xf32>
    %31 = tpu.matmul %28, %30, %cst_20 {dimension_numbers = #tpu.dot_dimension_numbers<[1], [0], [0], [1], [0, 0, 1, 1], [], []>} : vector<16x64xf32>, vector<64x128xf32>, vector<16x128xf32> -> vector<16x128xf32>
    %32 = arith.addf %27, %31 : vector<16x128xf32>
    %33 = vector.extract_strided_slice %3 {offsets = [6, 0], sizes = [16, 64], strides = [1, 1]} : vector<22x64xf32> to vector<16x64xf32>
    %c6 = arith.constant 6 : index
    %c0_21 = arith.constant 0 : index
    %c0_22 = arith.constant 0 : index
    %34 = vector.load %arg2[%c6, %c0_21, %c0_22] : memref<7x64x128xf32, #tpu.memory_space<vmem>>, vector<1x64x128xf32>
    %35 = vector.shape_cast %34 : vector<1x64x128xf32> to vector<64x128xf32>
    %cst_23 = arith.constant dense<0.000000e+00> : vector<16x128xf32>
    %36 = tpu.matmul %33, %35, %cst_23 {dimension_numbers = #tpu.dot_dimension_numbers<[1], [0], [0], [1], [0, 0, 1, 1], [], []>} : vector<16x64xf32>, vector<64x128xf32>, vector<16x128xf32> -> vector<16x128xf32>
    %37 = arith.addf %32, %36 : vector<16x128xf32>
    %c0_24 = arith.constant 0 : index
    %c0_25 = arith.constant 0 : index
    %38 = vector.load %arg3[%c0_24, %c0_25] : memref<1x128xf32, #tpu.memory_space<vmem>>, vector<1x128xf32>
    %39 = vector.broadcast %38 : vector<1x128xf32> to vector<16x128xf32>
    %40 = arith.addf %37, %39 : vector<16x128xf32>
    %cst_26 = arith.constant 0.000000e+00 : f32
    %41 = vector.broadcast %cst_26 : f32 to vector<16x128xf32>
    %42 = arith.maximumf %40, %41 : vector<16x128xf32>
    %c0_27 = arith.constant 0 : index
    %c0_28 = arith.constant 0 : index
    %c0_29 = arith.constant 0 : index
    %43 = vector.load %arg4[%c0_27, %c0_28, %c0_29] : memref<1x16x128xf32, #tpu.memory_space<vmem>>, vector<1x16x128xf32>
    %44 = vector.shape_cast %43 : vector<1x16x128xf32> to vector<16x128xf32>
    %45 = vector.shape_cast %42 : vector<16x128xf32> to vector<1x16x128xf32>
    tpu.vector_store %arg4[%c0_27, %c0_28, %c0_29], %45 {strides = array<i32>} : memref<1x16x128xf32, #tpu.memory_space<vmem>>, vector<1x16x128xf32>,
    return
  }
  func.func @transform_0(%arg0: i32) -> (i32, i32, i32) {
    %c0_i32 = arith.constant 0 : i32
    %c0_i32_0 = arith.constant 0 : i32
    %c0_i32_1 = arith.constant 0 : i32
    return %arg0, %c0_i32, %c0_i32_0 : i32, i32, i32
  }
  func.func @transform_1(%arg0: i32) -> (i32, i32, i32) {
    %c0_i32 = arith.constant 0 : i32
    %c0_i32_0 = arith.constant 0 : i32
    %c0_i32_1 = arith.constant 0 : i32
    %c0_i32_2 = arith.constant 0 : i32
    return %c0_i32, %c0_i32_0, %c0_i32_1 : i32, i32, i32
  }
  func.func @transform_2(%arg0: i32) -> (i32, i32) {
    %c0_i32 = arith.constant 0 : i32
    %c0_i32_0 = arith.constant 0 : i32
    %c0_i32_1 = arith.constant 0 : i32
    return %c0_i32, %c0_i32_0 : i32, i32
  }
  func.func @transform_3(%arg0: i32) -> (i32, i32, i32) {
    %c0_i32 = arith.constant 0 : i32
    %c0_i32_0 = arith.constant 0 : i32
    %c0_i32_1 = arith.constant 0 : i32
    return %arg0, %c0_i32, %c0_i32_0 : i32, i32, i32
  }
}

</mosaic_0001>

<llo_original>
// kernel: tpu_custom_call.1
$region0: #{tpu_custom_call.1}
  #allocation0 [shape = 'u32[]', space=smem, size = 0x4, offset = 0x4, fixed_abs, tag = 'smem constant byte address 0x4 - core index']
  #allocation1 [shape = 'u32[144,128]{1,0:T(1,128)}', space=vmem, size = 0x12000, scoped, tag = 'internal scratch']
  %s0 = inlined_call_operand.hbm [shape: f32[2,16,64], index: 0, kind: input, shape index: {}]
  %s1 = inlined_call_operand.hbm [shape: f32[7,64,128], index: 1, kind: input, shape index: {}]
  %s2 = inlined_call_operand.vmem [shape: f32[1,128], index: 2, kind: input, shape index: {}]
  %s3 = inlined_call_operand.hbm [shape: f32[2,16,128], index: 3, kind: output, shape index: {}]
  %s4 = sld [smem:[#allocation0]]
  $region53: #{tpu_custom_call.1} parent=0
    _
  %s6 = ssub.s32 1, %s4
  %s7 = scalar_select 0, %s6, %s4
  $region1: #{tpu_custom_call.1} parent=0
    #allocation2 [shape = 'u8[16384]{0}', space=vmem, size = 0x4000, scoped, tag = 'input window, operand 0']
    #allocation3 [shape = 's32[2]{0}', space=sflag, size = 0x8, scoped, tag = 'scoped memory for tpu_custom_call.1']
    #allocation4 [shape = 's32[2]{0}', space=sflag, size = 0x8, scoped, tag = 'scoped memory for tpu_custom_call.1']
    #allocation5 [shape = 'u8[229376]{0}', space=vmem, size = 0x38000, scoped, tag = 'input window, operand 1, single buffered']
    #allocation6 [shape = 's32[1]{0}', space=sflag, size = 0x4, scoped, tag = 'scoped memory for tpu_custom_call.1']
    #allocation7 [shape = 'u8[16384]{0}', space=vmem, size = 0x4000, scoped, tag = 'output window, operand 0']
    %8 = vsyncpa [#allocation3], 0
    %s9 = scalar_lea.sflag [#allocation3], 1
    %10 = vsyncpa %s9, 0
    %11 = vsyncpa [#allocation6], 0
    %12 = vsyncpa [#allocation4], 0
    %s13 = scalar_lea.sflag [#allocation4], 1
    %14 = vsyncpa %s13, 0
    loop: start=0, step=1, limit=4
    $region2: #{tpu_custom_call.1} parent=1 // loop_pre_header
      _
    $region3: #{tpu_custom_call.1} parent=1 // loop_header
      %s16 = sphi 0, %s20
      %p17 = scmp.ge.s32.totalorder %s16, 4
      %s26 = sphi 0, %s28
      %s29 = sphi 0, %s26
      %s30 = sphi 0, %s29
      %s46 = sphi 0, %s30
      %s50 = sphi 0, %s50
      %s52 = sphi 0, %s50
      %s53 = sphi 0, %s52
      %s67 = sphi 0, %s53
      %s71 = sphi 0, %s71
      %s73 = sphi 0, %s71
      %s74 = sphi 0, %s73
      %s88 = sphi 0, %s74
      %s94 = sphi 0, %s96
      %s97 = sphi 0, %s94
      %s98 = sphi 0, %s97
      %s114 = sphi 0, %s98
    $region4: #{tpu_custom_call.1} parent=1 // loop_header_branch
      %19 = sbr.rel (%p17) target = $region8
    $region5: #{tpu_custom_call.1} parent=1 // loop_body
      %s21 = ssub.s32 %s16, 1
      %s22 = ssub.s32 %s16, 2
      %s23 = sadd.s32 %s16, 1
      %s24 = ssub.s32 %s16, %s23
      %p25 = scmp.eq.s32.totalorder %s24, 0
      %s27 = sadd.s32 %s26, 1
      %s28 = scalar_select %p25, %s26, %s27
      %p31 = pneg %p25
      %p32 = scmp.eq.s32.totalorder %s16, 1
      %p33 = por %p31, %p32
      %p34 = scmp.ne.s32.totalorder %s26, %s29
      %p35 = scmp.eq.s32.totalorder %s16, 0
      %p36 = por %p34, %p35
      %p37 = scmp.ne.s32.totalorder %s26, %s29
      %p38 = scmp.eq.s32.totalorder %s21, 1
      %p39 = por %p37, %p38
      %p40 = scmp.ne.s32.totalorder %s29, %s30
      %p41 = scmp.eq.s32.totalorder %s21, 0
      %p42 = por %p40, %p41
      %p43 = scmp.ne.s32.totalorder %s29, %s30
      %p44 = scmp.eq.s32.totalorder %s22, 1
      %p45 = por %p43, %p44
      %p47 = scmp.ne.s32.totalorder %s30, %s46
      %p48 = scmp.eq.s32.totalorder %s22, 0
      %p49 = por %p47, %p48
      %s51 = sadd.s32 %s50, 1
      %p54 = scmp.eq.s32.totalorder %s16, 1
      %p55 = scmp.ne.s32.totalorder %s50, %s52
      %p56 = scmp.eq.s32.totalorder %s16, 0
      %p57 = por %p55, %p56
      %p58 = scmp.ne.s32.totalorder %s50, %s52
      %p59 = scmp.eq.s32.totalorder %s21, 1
      %p60 = por %p58, %p59
      %p61 = scmp.ne.s32.totalorder %s52, %s53
      %p62 = scmp.eq.s32.totalorder %s21, 0
      %p63 = por %p61, %p62
      %p64 = scmp.ne.s32.totalorder %s52, %s53
      %p65 = scmp.eq.s32.totalorder %s22, 1
      %p66 = por %p64, %p65
      %p68 = scmp.ne.s32.totalorder %s53, %s67
      %p69 = scmp.eq.s32.totalorder %s22, 0
      %p70 = por %p68, %p69
      %s72 = sadd.s32 %s71, 1
      %p75 = scmp.eq.s32.totalorder %s16, 1
      %p76 = scmp.ne.s32.totalorder %s71, %s73
      %p77 = scmp.eq.s32.totalorder %s16, 0
      %p78 = por %p76, %p77
      %p79 = scmp.ne.s32.totalorder %s71, %s73
      %p80 = scmp.eq.s32.totalorder %s21, 1
      %p81 = por %p79, %p80
      %p82 = scmp.ne.s32.totalorder %s73, %s74
      %p83 = scmp.eq.s32.totalorder %s21, 0
      %p84 = por %p82, %p83
      %p85 = scmp.ne.s32.totalorder %s73, %s74
      %p86 = scmp.eq.s32.totalorder %s22, 1
      %p87 = por %p85, %p86
      %p89 = scmp.ne.s32.totalorder %s74, %s88
      %p90 = scmp.eq.s32.totalorder %s22, 0
      %p91 = por %p89, %p90
      %s92 = ssub.s32 %s16, %s23
      %p93 = scmp.eq.s32.totalorder %s92, 0
      %s95 = sadd.s32 %s94, 1
      %s96 = scalar_select %p93, %s94, %s95
      %p99 = pneg %p93
      %p100 = scmp.eq.s32.totalorder %s16, 1
      %p101 = por %p99, %p100
      %p102 = scmp.ne.s32.totalorder %s94, %s97
      %p103 = scmp.eq.s32.totalorder %s16, 0
      %p104 = por %p102, %p103
      %p105 = scmp.ne.s32.totalorder %s94, %s97
      %p106 = scmp.eq.s32.totalorder %s21, 1
      %p107 = por %p105, %p106
      %p108 = scmp.ne.s32.totalorder %s97, %s98
      %p109 = scmp.eq.s32.totalorder %s21, 0
      %p110 = por %p108, %p109
      %p111 = scmp.ne.s32.totalorder %s97, %s98
      %p112 = scmp.eq.s32.totalorder %s22, 1
      %p113 = por %p111, %p112
      %p115 = scmp.ne.s32.totalorder %s98, %s114
      %p116 = scmp.eq.s32.totalorder %s22, 0
      %p117 = por %p115, %p116
      %p118 = scmp.le.s32.totalorder 1, %s16
      %p119 = scmp.lt.s32.totalorder %s16, 3
      %p120 = pnand %p118, %p119
      %p121 = pneg %p120
      // Predicated region
      $region9: #{tpu_custom_call.1} parent=5 // pred_check
        _
      $region10: #{tpu_custom_call.1} parent=5 // pred_check_branch
        %123 = sbr.rel (%p120) target = $region12
      $region11: #{tpu_custom_call.1} parent=5 // pred_region
        %s124 = ssub.s32 %s16, 1
        // Predicated region
        $region13: #{tpu_custom_call.1} parent=11 // pred_check
          %p125 = pneg %p63
        $region14: #{tpu_custom_call.1} parent=11 // pred_check_branch
          %127 = sbr.rel (%p125) target = $region16
        $region15: #{tpu_custom_call.1} parent=11 // pred_region
          %s129 = ssub.s32 7168, 7168
          %130 = vsyncadd [#allocation6], %s129
          %s131 = sshll.u32 [#allocation5], 4
          %s132 = int_to_ptr.vmem [resolvable:$true] %s131
          %137 = dma.hbm_to_vmem [thread:$0]  %s1, 7168, %s132, [#allocation6], 128, 128, 8
        $region16: #{tpu_custom_call.1} parent=11 // pred_fallthru
          _
        // Predicated region
        $region17: #{tpu_custom_call.1} parent=11 // pred_check
          %p138 = pneg %p84
        $region18: #{tpu_custom_call.1} parent=11 // pred_check_branch
          %140 = sbr.rel (%p138) target = $region20
        $region19: #{tpu_custom_call.1} parent=11 // pred_region
          _
        $region20: #{tpu_custom_call.1} parent=11 // pred_fallthru
          _
      $region12: #{tpu_custom_call.1} parent=5 // pred_fallthru
        _
      %p141 = scmp.lt.s32.totalorder %s16, 2
      // Predicated region
      $region21: #{tpu_custom_call.1} parent=5 // pred_check
        %p142 = pneg %p141
      $region22: #{tpu_custom_call.1} parent=5 // pred_check_branch
        %144 = sbr.rel (%p142) target = $region24
      $region23: #{tpu_custom_call.1} parent=5 // pred_region
        // Predicated region
        $region25: #{tpu_custom_call.1} parent=23 // pred_check
          %p145 = pneg %p36
        $region26: #{tpu_custom_call.1} parent=23 // pred_check_branch
          %147 = sbr.rel (%p145) target = $region28
        $region27: #{tpu_custom_call.1} parent=23 // pred_region
          %s148 = sand.u32 %s26, 1
          %s149 = scalar_lea.sflag [#allocation3], %s148
          %s150 = sand.u32 %s26, 1
          %s151 = smul.addr %s150, 16
          %s152 = scalar_lea.vmem [#allocation2], %s151
          %s154 = ssub.s32 256, 256
          %155 = vsyncadd %s149, %s154
          %s156 = smul.addr %s16, 2
          %s157 = smul.addr %s156, 128
          %s158 = scalar_lea.hbm %s0, %s157
          %s159 = sshll.u32 %s152, 4
          %s160 = int_to_ptr.vmem [resolvable:$true] %s159
          %165 = dma.hbm_to_vmem [thread:$0]  %s158, 256, %s160, %s149, 128, 128, 8
        $region28: #{tpu_custom_call.1} parent=23 // pred_fallthru
          _
      $region24: #{tpu_custom_call.1} parent=5 // pred_fallthru
        _
      %p166 = scmp.le.s32.totalorder 1, %s16
      %p167 = scmp.lt.s32.totalorder %s16, 3
      %p168 = pnand %p166, %p167
      %p169 = pneg %p168
      // Predicated region
      $region29: #{tpu_custom_call.1} parent=5 // pred_check
        _
      $region30: #{tpu_custom_call.1} parent=5 // pred_check_branch
        %171 = sbr.rel (%p168) target = $region32
      $region31: #{tpu_custom_call.1} parent=5 // pred_region
        %s172 = ssub.s32 %s16, 1
        %s173 = sand.u32 %s29, 1
        %s174 = scalar_lea.sflag [#allocation3], %s173
        %s175 = sand.u32 %s29, 1
        %s176 = smul.addr %s175, 16
        %s177 = scalar_lea.vmem [#allocation2], %s176
        // Predicated region
        $region33: #{tpu_custom_call.1} parent=31 // pred_check
          %p178 = pneg %p42
        $region34: #{tpu_custom_call.1} parent=31 // pred_check_branch
          %180 = sbr.rel (%p178) target = $region36
        $region35: #{tpu_custom_call.1} parent=31 // pred_region
          %181 = dma.done %s174, 256
        $region36: #{tpu_custom_call.1} parent=31 // pred_fallthru
          _
        // Predicated region
        $region37: #{tpu_custom_call.1} parent=31 // pred_check
          %p182 = pneg %p63
        $region38: #{tpu_custom_call.1} parent=31 // pred_check_branch
          %184 = sbr.rel (%p182) target = $region40
        $region39: #{tpu_custom_call.1} parent=31 // pred_region
          %185 = dma.done [#allocation6], 7168
        $region40: #{tpu_custom_call.1} parent=31 // pred_fallthru
          _
        %s186 = sand.u32 %s29, 1
        %s187 = scalar_lea.sflag [#allocation3], %s186
        %s188 = sand.u32 %s29, 1
        %s189 = smul.addr %s188, 16
        %s190 = scalar_lea.vmem [#allocation2], %s189
        %p191 = pneg %p42
        %p192 = pneg %p39
        %p193 = pneg %p63
        %p194 = pneg %p60
        %p195 = pneg %p84
        %p196 = pneg %p81
        %p197 = pneg %p110
        %p198 = pneg %p107
        %s199 = sand.u32 %s97, 1
        %s200 = scalar_lea.sflag [#allocation4], %s199
        %s201 = sand.u32 %s97, 1
        %s202 = smul.addr %s201, 16
        %s203 = scalar_lea.vmem [#allocation7], %s202
        %v204 = vld [vmem:[%s177] sm:$0xff]
        %v205 = vld [vmem:[%s177 + $0x8] sm:$0xff]
        %vm208 = vcmask 1042432
        %v209 = vrot.slane %v204, 5
        %v210 = vrot.slane %v205, 5
        %v211 = vsel %vm208, %v209, %v210
        %v214 = vsel %vm208, 0.0, %v209
        %v215 = vsel %vm208, %v210, 0.0
        %v216 = vld [vmem:[#allocation5] sm:$0xff]
        %v217 = vld [vmem:[#allocation5 + $0x8] sm:$0xff]
        %v218 = vld [vmem:[#allocation5 + $0x10] sm:$0xff]
        %v219 = vld [vmem:[#allocation5 + $0x18] sm:$0xff]
        %v220 = vld [vmem:[#allocation5 + $0x20] sm:$0xff]
        %v221 = vld [vmem:[#allocation5 + $0x28] sm:$0xff]
        %v222 = vld [vmem:[#allocation5 + $0x30] sm:$0xff]
        %v223 = vld [vmem:[#allocation5 + $0x38] sm:$0xff]
        %s224 = scalar_lea.vmem [#allocation5], 64
        %v225 = vld [vmem:[%s224] sm:$0xff]
        %v226 = vld [vmem:[%s224 + $0x8] sm:$0xff]
        %v227 = vld [vmem:[%s224 + $0x10] sm:$0xff]
        %v228 = vld [vmem:[%s224 + $0x18] sm:$0xff]
        %v229 = vld [vmem:[%s224 + $0x20] sm:$0xff]
        %v230 = vld [vmem:[%s224 + $0x28] sm:$0xff]
        %v231 = vld [vmem:[%s224 + $0x30] sm:$0xff]
        %v232 = vld [vmem:[%s224 + $0x38] sm:$0xff]
        %vm235 = vcmask 1046528
        %v236 = vrot.slane %v214, 1
        %v237 = vrot.slane %v211, 1
        %v238 = vsel %vm235, %v236, %v237
        %v239 = vrot.slane %v215, 1
        %v240 = vsel %vm235, %v237, %v239
        %vm241 = vcmask 523264
        %v242 = vsel %vm241, %v238, 0
        %v244 = vsel %vm241, %v240, 0
        %246 = vmatprep.subr.mxu0 0.0
        %247 = vmatpush1.msra.mxu0 0.0
        %248 = vmatprep.subr.mxu0 0.0
        %249 = vmatpush1.msra.mxu0 0.0
        %250 = vmatprep.subr.mxu0 0.0
        %251 = vmatpush1.msra.mxu0 0.0
        %252 = vmatprep.subr.mxu0 0.0
        %253 = vmatpush1.msra.mxu0 0.0
        %254 = vmatprep.subr.mxu0 0.0
        %255 = vmatpush1.msra.mxu0 0.0
        %256 = vmatprep.subr.mxu0 0.0
        %257 = vmatpush1.msra.mxu0 0.0
        %258 = vmatprep.subr.mxu0 0.0
        %259 = vmatpush1.msra.mxu0 0.0
        %260 = vmatprep.subr.mxu0 0.0
        %261 = vmatpush1.msra.mxu0 0.0
        %262 = vmatprep.subr.mxu0 0.0
        %263 = vmatpush1.msra.mxu0 %v232
        %264 = vmatprep.subr.mxu0 0.0
        %265 = vmatpush1.msra.mxu0 %v231
        %266 = vmatprep.subr.mxu0 0.0
        %267 = vmatpush1.msra.mxu0 %v230
        %268 = vmatprep.subr.mxu0 0.0
        %269 = vmatpush1.msra.mxu0 %v229
        %270 = vmatprep.subr.mxu0 0.0
        %271 = vmatpush1.msra.mxu0 %v228
        %272 = vmatprep.subr.mxu0 0.0
        %273 = vmatpush1.msra.mxu0 %v227
        %274 = vmatprep.subr.mxu0 0.0
        %275 = vmatpush1.msra.mxu0 %v226
        %276 = vmatprep.subr.mxu0 0.0
        %277 = vmatpush1.msra.mxu0 %v225
        %278 = vmatprep.subr.mxu0 0.0
        %279 = vmatpush2.msra.mxu0 0.0
        %280 = vmatprep.subr.mxu0 0.0
        %281 = vmatpush2.msra.mxu0 0.0
        %282 = vmatprep.subr.mxu0 0.0
        %283 = vmatpush2.msra.mxu0 0.0
        %284 = vmatprep.subr.mxu0 0.0
        %285 = vmatpush2.msra.mxu0 0.0
        %286 = vmatprep.subr.mxu0 0.0
        %287 = vmatpush2.msra.mxu0 0.0
        %288 = vmatprep.subr.mxu0 0.0
        %289 = vmatpush2.msra.mxu0 0.0
        %290 = vmatprep.subr.mxu0 0.0
        %291 = vmatpush2.msra.mxu0 0.0
        %292 = vmatprep.subr.mxu0 0.0
        %293 = vmatpush2.msra.mxu0 0.0
        %294 = vmatprep.subr.mxu0 0.0
        %295 = vmatpush2.msra.mxu0 0.0
        %296 = vmatprep.subr.mxu0 0.0
        %297 = vmatpush2.msra.mxu0 0.0
        %298 = vmatprep.subr.mxu0 0.0
        %299 = vmatpush2.msra.mxu0 0.0
        %300 = vmatprep.subr.mxu0 0.0
        %301 = vmatpush2.msra.mxu0 0.0
        %302 = vmatprep.subr.mxu0 0.0
        %303 = vmatpush2.msra.mxu0 0.0
        %304 = vmatprep.subr.mxu0 0.0
        %305 = vmatpush2.msra.mxu0 0.0
        %306 = vmatprep.subr.mxu0 0.0
        %307 = vmatpush2.msra.mxu0 0.0
        %308 = vmatprep.subr.mxu0 0.0
        %309 = vmatpush2.msra.mxu0 0.0
        %310 = vmatprep.mubr.f32.mxu0 0.0
        %311 = vmatmul.mubr.f32.gmra.mxu0 %v242
        %v312 = vpop.f32.mrf.mxu0
        %v313 = vadd.f32 0.0, %v312
        %v314 = vpop.f32.mrf.mxu0
        %315 = vmatprep.mubr.f32.mxu0 0.0
        %316 = vmatmul.mubr.f32.gmra.mxu0 %v244
        %v317 = vpop.f32.mrf.mxu0
        %v318 = vadd.f32 0.0, %v317
        %v319 = vpop.f32.mrf.mxu0
        %320 = vdwg.mxu0
        %v321 = vsel %vm241, %v214, 0
        %v323 = vsel %vm241, %v211, 0
        %325 = vmatprep.subr.mxu0 0.0
        %326 = vmatpush1.msra.mxu0 0.0
        %327 = vmatprep.subr.mxu0 0.0
        %328 = vmatpush1.msra.mxu0 0.0
        %329 = vmatprep.subr.mxu0 0.0
        %330 = vmatpush1.msra.mxu0 0.0
        %331 = vmatprep.subr.mxu0 0.0
        %332 = vmatpush1.msra.mxu0 0.0
        %333 = vmatprep.subr.mxu0 0.0
        %334 = vmatpush1.msra.mxu0 0.0
        %335 = vmatprep.subr.mxu0 0.0
        %336 = vmatpush1.msra.mxu0 0.0
        %337 = vmatprep.subr.mxu0 0.0
        %338 = vmatpush1.msra.mxu0 0.0
        %339 = vmatprep.subr.mxu0 0.0
        %340 = vmatpush1.msra.mxu0 0.0
        %341 = vmatprep.subr.mxu0 0.0
        %342 = vmatpush1.msra.mxu0 %v223
        %343 = vmatprep.subr.mxu0 0.0
        %344 = vmatpush1.msra.mxu0 %v222
        %345 = vmatprep.subr.mxu0 0.0
        %346 = vmatpush1.msra.mxu0 %v221
        %347 = vmatprep.subr.mxu0 0.0
        %348 = vmatpush1.msra.mxu0 %v220
        %349 = vmatprep.subr.mxu0 0.0
        %350 = vmatpush1.msra.mxu0 %v219
        %351 = vmatprep.subr.mxu0 0.0
        %352 = vmatpush1.msra.mxu0 %v218
        %353 = vmatprep.subr.mxu0 0.0
        %354 = vmatpush1.msra.mxu0 %v217
        %355 = vmatprep.subr.mxu0 0.0
        %356 = vmatpush1.msra.mxu0 %v216
        %357 = vmatprep.subr.mxu0 0.0
        %358 = vmatpush2.msra.mxu0 0.0
        %359 = vmatprep.subr.mxu0 0.0
        %360 = vmatpush2.msra.mxu0 0.0
        %361 = vmatprep.subr.mxu0 0.0
        %362 = vmatpush2.msra.mxu0 0.0
        %363 = vmatprep.subr.mxu0 0.0
        %364 = vmatpush2.msra.mxu0 0.0
        %365 = vmatprep.subr.mxu0 0.0
        %366 = vmatpush2.msra.mxu0 0.0
        %367 = vmatprep.subr.mxu0 0.0
        %368 = vmatpush2.msra.mxu0 0.0
        %369 = vmatprep.subr.mxu0 0.0
        %370 = vmatpush2.msra.mxu0 0.0
        %371 = vmatprep.subr.mxu0 0.0
        %372 = vmatpush2.msra.mxu0 0.0
        %373 = vmatprep.subr.mxu0 0.0
        %374 = vmatpush2.msra.mxu0 0.0
        %375 = vmatprep.subr.mxu0 0.0
        %376 = vmatpush2.msra.mxu0 0.0
        %377 = vmatprep.subr.mxu0 0.0
        %378 = vmatpush2.msra.mxu0 0.0
        %379 = vmatprep.subr.mxu0 0.0
        %380 = vmatpush2.msra.mxu0 0.0
        %381 = vmatprep.subr.mxu0 0.0
        %382 = vmatpush2.msra.mxu0 0.0
        %383 = vmatprep.subr.mxu0 0.0
        %384 = vmatpush2.msra.mxu0 0.0
        %385 = vmatprep.subr.mxu0 0.0
        %386 = vmatpush2.msra.mxu0 0.0
        %387 = vmatprep.subr.mxu0 0.0
        %388 = vmatpush2.msra.mxu0 0.0
        %389 = vmatprep.mubr.f32.mxu0 0.0
        %390 = vmatmul.mubr.f32.gmra.mxu0 %v321
        %v391 = vpop.f32.mrf.mxu0
        %v392 = vadd.f32 %v313, %v391
        %v393 = vpop.f32.mrf.mxu0
        %394 = vmatprep.mubr.f32.mxu0 0.0
        %395 = vmatmul.mubr.f32.gmra.mxu0 %v323
        %v396 = vpop.f32.mrf.mxu0
        %v397 = vadd.f32 %v318, %v396
        %v398 = vpop.f32.mrf.mxu0
        %399 = vdwg.mxu0
        %s400 = scalar_lea.vmem [#allocation5], 128
        %v401 = vld [vmem:[%s400] sm:$0xff]
        %v402 = vld [vmem:[%s400 + $0x8] sm:$0xff]
        %v403 = vld [vmem:[%s400 + $0x10] sm:$0xff]
        %v404 = vld [vmem:[%s400 + $0x18] sm:$0xff]
        %v405 = vld [vmem:[%s400 + $0x20] sm:$0xff]
        %v406 = vld [vmem:[%s400 + $0x28] sm:$0xff]
        %v407 = vld [vmem:[%s400 + $0x30] sm:$0xff]
        %v408 = vld [vmem:[%s400 + $0x38] sm:$0xff]
        %vm409 = vcmask 1045504
        %v410 = vrot.slane %v214, 2
        %v411 = vrot.slane %v211, 2
        %v412 = vsel %vm409, %v410, %v411
        %v413 = vrot.slane %v215, 2
        %v414 = vsel %vm409, %v411, %v413
        %v415 = vsel %vm241, %v412, 0
        %v417 = vsel %vm241, %v414, 0
        %419 = vmatprep.subr.mxu0 0.0
        %420 = vmatpush1.msra.mxu0 0.0
        %421 = vmatprep.subr.mxu0 0.0
        %422 = vmatpush1.msra.mxu0 0.0
        %423 = vmatprep.subr.mxu0 0.0
        %424 = vmatpush1.msra.mxu0 0.0
        %425 = vmatprep.subr.mxu0 0.0
        %426 = vmatpush1.msra.mxu0 0.0
        %427 = vmatprep.subr.mxu0 0.0
        %428 = vmatpush1.msra.mxu0 0.0
        %429 = vmatprep.subr.mxu0 0.0
        %430 = vmatpush1.msra.mxu0 0.0
        %431 = vmatprep.subr.mxu0 0.0
        %432 = vmatpush1.msra.mxu0 0.0
        %433 = vmatprep.subr.mxu0 0.0
        %434 = vmatpush1.msra.mxu0 0.0
        %435 = vmatprep.subr.mxu0 0.0
        %436 = vmatpush1.msra.mxu0 %v408
        %437 = vmatprep.subr.mxu0 0.0
        %438 = vmatpush1.msra.mxu0 %v407
        %439 = vmatprep.subr.mxu0 0.0
        %440 = vmatpush1.msra.mxu0 %v406
        %441 = vmatprep.subr.mxu0 0.0
        %442 = vmatpush1.msra.mxu0 %v405
        %443 = vmatprep.subr.mxu0 0.0
        %444 = vmatpush1.msra.mxu0 %v404
        %445 = vmatprep.subr.mxu0 0.0
        %446 = vmatpush1.msra.mxu0 %v403
        %447 = vmatprep.subr.mxu0 0.0
        %448 = vmatpush1.msra.mxu0 %v402
        %449 = vmatprep.subr.mxu0 0.0
        %450 = vmatpush1.msra.mxu0 %v401
        %451 = vmatprep.subr.mxu0 0.0
        %452 = vmatpush2.msra.mxu0 0.0
        %453 = vmatprep.subr.mxu0 0.0
        %454 = vmatpush2.msra.mxu0 0.0
        %455 = vmatprep.subr.mxu0 0.0
        %456 = vmatpush2.msra.mxu0 0.0
        %457 = vmatprep.subr.mxu0 0.0
        %458 = vmatpush2.msra.mxu0 0.0
        %459 = vmatprep.subr.mxu0 0.0
        %460 = vmatpush2.msra.mxu0 0.0
        %461 = vmatprep.subr.mxu0 0.0
        %462 = vmatpush2.msra.mxu0 0.0
        %463 = vmatprep.subr.mxu0 0.0
        %464 = vmatpush2.msra.mxu0 0.0
        %465 = vmatprep.subr.mxu0 0.0
        %466 = vmatpush2.msra.mxu0 0.0
        %467 = vmatprep.subr.mxu0 0.0
        %468 = vmatpush2.msra.mxu0 0.0
        %469 = vmatprep.subr.mxu0 0.0
        %470 = vmatpush2.msra.mxu0 0.0
        %471 = vmatprep.subr.mxu0 0.0
        %472 = vmatpush2.msra.mxu0 0.0
        %473 = vmatprep.subr.mxu0 0.0
        %474 = vmatpush2.msra.mxu0 0.0
        %475 = vmatprep.subr.mxu0 0.0
        %476 = vmatpush2.msra.mxu0 0.0
        %477 = vmatprep.subr.mxu0 0.0
        %478 = vmatpush2.msra.mxu0 0.0
        %479 = vmatprep.subr.mxu0 0.0
        %480 = vmatpush2.msra.mxu0 0.0
        %481 = vmatprep.subr.mxu0 0.0
        %482 = vmatpush2.msra.mxu0 0.0
        %483 = vmatprep.mubr.f32.mxu0 0.0
        %484 = vmatmul.mubr.f32.gmra.mxu0 %v415
        %v485 = vpop.f32.mrf.mxu0
        %v486 = vadd.f32 0.0, %v485
        %v487 = vpop.f32.mrf.mxu0
        %488 = vmatprep.mubr.f32.mxu0 0.0
        %489 = vmatmul.mubr.f32.gmra.mxu0 %v417
        %v490 = vpop.f32.mrf.mxu0
        %v491 = vadd.f32 0.0, %v490
        %v492 = vpop.f32.mrf.mxu0
        %493 = vdwg.mxu0
        %v494 = vadd.f32 %v392, %v486
        %v495 = vadd.f32 %v397, %v491
        %s496 = scalar_lea.vmem [#allocation5], 192
        %v497 = vld [vmem:[%s496] sm:$0xff]
        %v498 = vld [vmem:[%s496 + $0x8] sm:$0xff]
        %v499 = vld [vmem:[%s496 + $0x10] sm:$0xff]
        %v500 = vld [vmem:[%s496 + $0x18] sm:$0xff]
        %v501 = vld [vmem:[%s496 + $0x20] sm:$0xff]
        %v502 = vld [vmem:[%s496 + $0x28] sm:$0xff]
        %v503 = vld [vmem:[%s496 + $0x30] sm:$0xff]
        %v504 = vld [vmem:[%s496 + $0x38] sm:$0xff]
        %vm505 = vcmask 1044480
        %v506 = vrot.slane %v214, 3
        %v507 = vrot.slane %v211, 3
        %v508 = vsel %vm505, %v506, %v507
        %v509 = vrot.slane %v215, 3
        %v510 = vsel %vm505, %v507, %v509
        %v511 = vsel %vm241, %v508, 0
        %v513 = vsel %vm241, %v510, 0
        %515 = vmatprep.subr.mxu0 0.0
        %516 = vmatpush1.msra.mxu0 0.0
        %517 = vmatprep.subr.mxu0 0.0
        %518 = vmatpush1.msra.mxu0 0.0
        %519 = vmatprep.subr.mxu0 0.0
        %520 = vmatpush1.msra.mxu0 0.0
        %521 = vmatprep.subr.mxu0 0.0
        %522 = vmatpush1.msra.mxu0 0.0
        %523 = vmatprep.subr.mxu0 0.0
        %524 = vmatpush1.msra.mxu0 0.0
        %525 = vmatprep.subr.mxu0 0.0
        %526 = vmatpush1.msra.mxu0 0.0
        %527 = vmatprep.subr.mxu0 0.0
        %528 = vmatpush1.msra.mxu0 0.0
        %529 = vmatprep.subr.mxu0 0.0
        %530 = vmatpush1.msra.mxu0 0.0
        %531 = vmatprep.subr.mxu0 0.0
        %532 = vmatpush1.msra.mxu0 %v504
        %533 = vmatprep.subr.mxu0 0.0
        %534 = vmatpush1.msra.mxu0 %v503
        %535 = vmatprep.subr.mxu0 0.0
        %536 = vmatpush1.msra.mxu0 %v502
        %537 = vmatprep.subr.mxu0 0.0
        %538 = vmatpush1.msra.mxu0 %v501
        %539 = vmatprep.subr.mxu0 0.0
        %540 = vmatpush1.msra.mxu0 %v500
        %541 = vmatprep.subr.mxu0 0.0
        %542 = vmatpush1.msra.mxu0 %v499
        %543 = vmatprep.subr.mxu0 0.0
        %544 = vmatpush1.msra.mxu0 %v498
        %545 = vmatprep.subr.mxu0 0.0
        %546 = vmatpush1.msra.mxu0 %v497
        %547 = vmatprep.subr.mxu0 0.0
        %548 = vmatpush2.msra.mxu0 0.0
        %549 = vmatprep.subr.mxu0 0.0
        %550 = vmatpush2.msra.mxu0 0.0
        %551 = vmatprep.subr.mxu0 0.0
        %552 = vmatpush2.msra.mxu0 0.0
        %553 = vmatprep.subr.mxu0 0.0
        %554 = vmatpush2.msra.mxu0 0.0
        %555 = vmatprep.subr.mxu0 0.0
        %556 = vmatpush2.msra.mxu0 0.0
        %557 = vmatprep.subr.mxu0 0.0
        %558 = vmatpush2.msra.mxu0 0.0
        %559 = vmatprep.subr.mxu0 0.0
        %560 = vmatpush2.msra.mxu0 0.0
        %561 = vmatprep.subr.mxu0 0.0
        %562 = vmatpush2.msra.mxu0 0.0
        %563 = vmatprep.subr.mxu0 0.0
        %564 = vmatpush2.msra.mxu0 0.0
        %565 = vmatprep.subr.mxu0 0.0
        %566 = vmatpush2.msra.mxu0 0.0
        %567 = vmatprep.subr.mxu0 0.0
        %568 = vmatpush2.msra.mxu0 0.0
        %569 = vmatprep.subr.mxu0 0.0
        %570 = vmatpush2.msra.mxu0 0.0
        %571 = vmatprep.subr.mxu0 0.0
        %572 = vmatpush2.msra.mxu0 0.0
        %573 = vmatprep.subr.mxu0 0.0
        %574 = vmatpush2.msra.mxu0 0.0
        %575 = vmatprep.subr.mxu0 0.0
        %576 = vmatpush2.msra.mxu0 0.0
        %577 = vmatprep.subr.mxu0 0.0
        %578 = vmatpush2.msra.mxu0 0.0
        %579 = vmatprep.mubr.f32.mxu0 0.0
        %580 = vmatmul.mubr.f32.gmra.mxu0 %v511
        %v581 = vpop.f32.mrf.mxu0
        %v582 = vadd.f32 0.0, %v581
        %v583 = vpop.f32.mrf.mxu0
        %584 = vmatprep.mubr.f32.mxu0 0.0
        %585 = vmatmul.mubr.f32.gmra.mxu0 %v513
        %v586 = vpop.f32.mrf.mxu0
        %v587 = vadd.f32 0.0, %v586
        %v588 = vpop.f32.mrf.mxu0
        %589 = vdwg.mxu0
        %v590 = vadd.f32 %v494, %v582
        %v591 = vadd.f32 %v495, %v587
        %s592 = scalar_lea.vmem [#allocation5], 256
        %v593 = vld [vmem:[%s592] sm:$0xff]
        %v594 = vld [vmem:[%s592 + $0x8] sm:$0xff]
        %v595 = vld [vmem:[%s592 + $0x10] sm:$0xff]
        %v596 = vld [vmem:[%s592 + $0x18] sm:$0xff]
        %v597 = vld [vmem:[%s592 + $0x20] sm:$0xff]
        %v598 = vld [vmem:[%s592 + $0x28] sm:$0xff]
        %v599 = vld [vmem:[%s592 + $0x30] sm:$0xff]
        %v600 = vld [vmem:[%s592 + $0x38] sm:$0xff]
        %vm601 = vcmask 1043456
        %v602 = vrot.slane %v214, 4
        %v603 = vrot.slane %v211, 4
        %v604 = vsel %vm601, %v602, %v603
        %v605 = vrot.slane %v215, 4
        %v606 = vsel %vm601, %v603, %v605
        %v607 = vsel %vm241, %v604, 0
        %v609 = vsel %vm241, %v606, 0
        %611 = vmatprep.subr.mxu0 0.0
        %612 = vmatpush1.msra.mxu0 0.0
        %613 = vmatprep.subr.mxu0 0.0
        %614 = vmatpush1.msra.mxu0 0.0
        %615 = vmatprep.subr.mxu0 0.0
        %616 = vmatpush1.msra.mxu0 0.0
        %617 = vmatprep.subr.mxu0 0.0
        %618 = vmatpush1.msra.mxu0 0.0
        %619 = vmatprep.subr.mxu0 0.0
        %620 = vmatpush1.msra.mxu0 0.0
        %621 = vmatprep.subr.mxu0 0.0
        %622 = vmatpush1.msra.mxu0 0.0
        %623 = vmatprep.subr.mxu0 0.0
        %624 = vmatpush1.msra.mxu0 0.0
        %625 = vmatprep.subr.mxu0 0.0
        %626 = vmatpush1.msra.mxu0 0.0
        %627 = vmatprep.subr.mxu0 0.0
        %628 = vmatpush1.msra.mxu0 %v600
        %629 = vmatprep.subr.mxu0 0.0
        %630 = vmatpush1.msra.mxu0 %v599
        %631 = vmatprep.subr.mxu0 0.0
        %632 = vmatpush1.msra.mxu0 %v598
        %633 = vmatprep.subr.mxu0 0.0
        %634 = vmatpush1.msra.mxu0 %v597
        %635 = vmatprep.subr.mxu0 0.0
        %636 = vmatpush1.msra.mxu0 %v596
        %637 = vmatprep.subr.mxu0 0.0
        %638 = vmatpush1.msra.mxu0 %v595
        %639 = vmatprep.subr.mxu0 0.0
        %640 = vmatpush1.msra.mxu0 %v594
        %641 = vmatprep.subr.mxu0 0.0
        %642 = vmatpush1.msra.mxu0 %v593
        %643 = vmatprep.subr.mxu0 0.0
        %644 = vmatpush2.msra.mxu0 0.0
        %645 = vmatprep.subr.mxu0 0.0
        %646 = vmatpush2.msra.mxu0 0.0
        %647 = vmatprep.subr.mxu0 0.0
        %648 = vmatpush2.msra.mxu0 0.0
        %649 = vmatprep.subr.mxu0 0.0
        %650 = vmatpush2.msra.mxu0 0.0
        %651 = vmatprep.subr.mxu0 0.0
        %652 = vmatpush2.msra.mxu0 0.0
        %653 = vmatprep.subr.mxu0 0.0
        %654 = vmatpush2.msra.mxu0 0.0
        %655 = vmatprep.subr.mxu0 0.0
        %656 = vmatpush2.msra.mxu0 0.0
        %657 = vmatprep.subr.mxu0 0.0
        %658 = vmatpush2.msra.mxu0 0.0
        %659 = vmatprep.subr.mxu0 0.0
        %660 = vmatpush2.msra.mxu0 0.0
        %661 = vmatprep.subr.mxu0 0.0
        %662 = vmatpush2.msra.mxu0 0.0
        %663 = vmatprep.subr.mxu0 0.0
        %664 = vmatpush2.msra.mxu0 0.0
        %665 = vmatprep.subr.mxu0 0.0
        %666 = vmatpush2.msra.mxu0 0.0
        %667 = vmatprep.subr.mxu0 0.0
        %668 = vmatpush2.msra.mxu0 0.0
        %669 = vmatprep.subr.mxu0 0.0
        %670 = vmatpush2.msra.mxu0 0.0
        %671 = vmatprep.subr.mxu0 0.0
        %672 = vmatpush2.msra.mxu0 0.0
        %673 = vmatprep.subr.mxu0 0.0
        %674 = vmatpush2.msra.mxu0 0.0
        %675 = vmatprep.mubr.f32.mxu0 0.0
        %676 = vmatmul.mubr.f32.gmra.mxu0 %v607
        %v677 = vpop.f32.mrf.mxu0
        %v678 = vadd.f32 0.0, %v677
        %v679 = vpop.f32.mrf.mxu0
        %680 = vmatprep.mubr.f32.mxu0 0.0
        %681 = vmatmul.mubr.f32.gmra.mxu0 %v609
        %v682 = vpop.f32.mrf.mxu0
        %v683 = vadd.f32 0.0, %v682
        %v684 = vpop.f32.mrf.mxu0
        %685 = vdwg.mxu0
        %v686 = vadd.f32 %v590, %v678
        %v687 = vadd.f32 %v591, %v683
        %s688 = scalar_lea.vmem [#allocation5], 320
        %v689 = vld [vmem:[%s688] sm:$0xff]
        %v690 = vld [vmem:[%s688 + $0x8] sm:$0xff]
        %v691 = vld [vmem:[%s688 + $0x10] sm:$0xff]
        %v692 = vld [vmem:[%s688 + $0x18] sm:$0xff]
        %v693 = vld [vmem:[%s688 + $0x20] sm:$0xff]
        %v694 = vld [vmem:[%s688 + $0x28] sm:$0xff]
        %v695 = vld [vmem:[%s688 + $0x30] sm:$0xff]
        %v696 = vld [vmem:[%s688 + $0x38] sm:$0xff]
        %v697 = vrot.slane %v214, 5
        %v698 = vrot.slane %v211, 5
        %v699 = vsel %vm208, %v697, %v698
        %v700 = vrot.slane %v215, 5
        %v701 = vsel %vm208, %v698, %v700
        %v702 = vsel %vm241, %v699, 0
        %v704 = vsel %vm241, %v701, 0
        %706 = vmatprep.subr.mxu0 0.0
        %707 = vmatpush1.msra.mxu0 0.0
        %708 = vmatprep.subr.mxu0 0.0
        %709 = vmatpush1.msra.mxu0 0.0
        %710 = vmatprep.subr.mxu0 0.0
        %711 = vmatpush1.msra.mxu0 0.0
        %712 = vmatprep.subr.mxu0 0.0
        %713 = vmatpush1.msra.mxu0 0.0
        %714 = vmatprep.subr.mxu0 0.0
        %715 = vmatpush1.msra.mxu0 0.0
        %716 = vmatprep.subr.mxu0 0.0
        %717 = vmatpush1.msra.mxu0 0.0
        %718 = vmatprep.subr.mxu0 0.0
        %719 = vmatpush1.msra.mxu0 0.0
        %720 = vmatprep.subr.mxu0 0.0
        %721 = vmatpush1.msra.mxu0 0.0
        %722 = vmatprep.subr.mxu0 0.0
        %723 = vmatpush1.msra.mxu0 %v696
        %724 = vmatprep.subr.mxu0 0.0
        %725 = vmatpush1.msra.mxu0 %v695
        %726 = vmatprep.subr.mxu0 0.0
        %727 = vmatpush1.msra.mxu0 %v694
        %728 = vmatprep.subr.mxu0 0.0
        %729 = vmatpush1.msra.mxu0 %v693
        %730 = vmatprep.subr.mxu0 0.0
        %731 = vmatpush1.msra.mxu0 %v692
        %732 = vmatprep.subr.mxu0 0.0
        %733 = vmatpush1.msra.mxu0 %v691
        %734 = vmatprep.subr.mxu0 0.0
        %735 = vmatpush1.msra.mxu0 %v690
        %736 = vmatprep.subr.mxu0 0.0
        %737 = vmatpush1.msra.mxu0 %v689
        %738 = vmatprep.subr.mxu0 0.0
        %739 = vmatpush2.msra.mxu0 0.0
        %740 = vmatprep.subr.mxu0 0.0
        %741 = vmatpush2.msra.mxu0 0.0
        %742 = vmatprep.subr.mxu0 0.0
        %743 = vmatpush2.msra.mxu0 0.0
        %744 = vmatprep.subr.mxu0 0.0
        %745 = vmatpush2.msra.mxu0 0.0
        %746 = vmatprep.subr.mxu0 0.0
        %747 = vmatpush2.msra.mxu0 0.0
        %748 = vmatprep.subr.mxu0 0.0
        %749 = vmatpush2.msra.mxu0 0.0
        %750 = vmatprep.subr.mxu0 0.0
        %751 = vmatpush2.msra.mxu0 0.0
        %752 = vmatprep.subr.mxu0 0.0
        %753 = vmatpush2.msra.mxu0 0.0
        %754 = vmatprep.subr.mxu0 0.0
        %755 = vmatpush2.msra.mxu0 0.0
        %756 = vmatprep.subr.mxu0 0.0
        %757 = vmatpush2.msra.mxu0 0.0
        %758 = vmatprep.subr.mxu0 0.0
        %759 = vmatpush2.msra.mxu0 0.0
        %760 = vmatprep.subr.mxu0 0.0
        %761 = vmatpush2.msra.mxu0 0.0
        %762 = vmatprep.subr.mxu0 0.0
        %763 = vmatpush2.msra.mxu0 0.0
        %764 = vmatprep.subr.mxu0 0.0
        %765 = vmatpush2.msra.mxu0 0.0
        %766 = vmatprep.subr.mxu0 0.0
        %767 = vmatpush2.msra.mxu0 0.0
        %768 = vmatprep.subr.mxu0 0.0
        %769 = vmatpush2.msra.mxu0 0.0
        %770 = vmatprep.mubr.f32.mxu0 0.0
        %771 = vmatmul.mubr.f32.gmra.mxu0 %v702
        %v772 = vpop.f32.mrf.mxu0
        %v773 = vadd.f32 0.0, %v772
        %v774 = vpop.f32.mrf.mxu0
        %775 = vmatprep.mubr.f32.mxu0 0.0
        %776 = vmatmul.mubr.f32.gmra.mxu0 %v704
        %v777 = vpop.f32.mrf.mxu0
        %v778 = vadd.f32 0.0, %v777
        %v779 = vpop.f32.mrf.mxu0
        %780 = vdwg.mxu0
        %v781 = vadd.f32 %v686, %v773
        %v782 = vadd.f32 %v687, %v778
        %s783 = scalar_lea.vmem [#allocation5], 384
        %v784 = vld [vmem:[%s783] sm:$0xff]
        %v785 = vld [vmem:[%s783 + $0x8] sm:$0xff]
        %v786 = vld [vmem:[%s783 + $0x10] sm:$0xff]
        %v787 = vld [vmem:[%s783 + $0x18] sm:$0xff]
        %v788 = vld [vmem:[%s783 + $0x20] sm:$0xff]
        %v789 = vld [vmem:[%s783 + $0x28] sm:$0xff]
        %v790 = vld [vmem:[%s783 + $0x30] sm:$0xff]
        %v791 = vld [vmem:[%s783 + $0x38] sm:$0xff]
        %vm792 = vcmask 1041408
        %v793 = vrot.slane %v214, 6
        %v794 = vrot.slane %v211, 6
        %v795 = vsel %vm792, %v793, %v794
        %v796 = vrot.slane %v215, 6
        %v797 = vsel %vm792, %v794, %v796
        %v798 = vsel %vm241, %v795, 0
        %v800 = vsel %vm241, %v797, 0
        %802 = vmatprep.subr.mxu0 0.0
        %803 = vmatpush1.msra.mxu0 0.0
        %804 = vmatprep.subr.mxu0 0.0
        %805 = vmatpush1.msra.mxu0 0.0
        %806 = vmatprep.subr.mxu0 0.0
        %807 = vmatpush1.msra.mxu0 0.0
        %808 = vmatprep.subr.mxu0 0.0
        %809 = vmatpush1.msra.mxu0 0.0
        %810 = vmatprep.subr.mxu0 0.0
        %811 = vmatpush1.msra.mxu0 0.0
        %812 = vmatprep.subr.mxu0 0.0
        %813 = vmatpush1.msra.mxu0 0.0
        %814 = vmatprep.subr.mxu0 0.0
        %815 = vmatpush1.msra.mxu0 0.0
        %816 = vmatprep.subr.mxu0 0.0
        %817 = vmatpush1.msra.mxu0 0.0
        %818 = vmatprep.subr.mxu0 0.0
        %819 = vmatpush1.msra.mxu0 %v791
        %820 = vmatprep.subr.mxu0 0.0
        %821 = vmatpush1.msra.mxu0 %v790
        %822 = vmatprep.subr.mxu0 0.0
        %823 = vmatpush1.msra.mxu0 %v789
        %824 = vmatprep.subr.mxu0 0.0
        %825 = vmatpush1.msra.mxu0 %v788
        %826 = vmatprep.subr.mxu0 0.0
        %827 = vmatpush1.msra.mxu0 %v787
        %828 = vmatprep.subr.mxu0 0.0
        %829 = vmatpush1.msra.mxu0 %v786
        %830 = vmatprep.subr.mxu0 0.0
        %831 = vmatpush1.msra.mxu0 %v785
        %832 = vmatprep.subr.mxu0 0.0
        %833 = vmatpush1.msra.mxu0 %v784
        %834 = vmatprep.subr.mxu0 0.0
        %835 = vmatpush2.msra.mxu0 0.0
        %836 = vmatprep.subr.mxu0 0.0
        %837 = vmatpush2.msra.mxu0 0.0
        %838 = vmatprep.subr.mxu0 0.0
        %839 = vmatpush2.msra.mxu0 0.0
        %840 = vmatprep.subr.mxu0 0.0
        %841 = vmatpush2.msra.mxu0 0.0
        %842 = vmatprep.subr.mxu0 0.0
        %843 = vmatpush2.msra.mxu0 0.0
        %844 = vmatprep.subr.mxu0 0.0
        %845 = vmatpush2.msra.mxu0 0.0
        %846 = vmatprep.subr.mxu0 0.0
        %847 = vmatpush2.msra.mxu0 0.0
        %848 = vmatprep.subr.mxu0 0.0
        %849 = vmatpush2.msra.mxu0 0.0
        %850 = vmatprep.subr.mxu0 0.0
        %851 = vmatpush2.msra.mxu0 0.0
        %852 = vmatprep.subr.mxu0 0.0
        %853 = vmatpush2.msra.mxu0 0.0
        %854 = vmatprep.subr.mxu0 0.0
        %855 = vmatpush2.msra.mxu0 0.0
        %856 = vmatprep.subr.mxu0 0.0
        %857 = vmatpush2.msra.mxu0 0.0
        %858 = vmatprep.subr.mxu0 0.0
        %859 = vmatpush2.msra.mxu0 0.0
        %860 = vmatprep.subr.mxu0 0.0
        %861 = vmatpush2.msra.mxu0 0.0
        %862 = vmatprep.subr.mxu0 0.0
        %863 = vmatpush2.msra.mxu0 0.0
        %864 = vmatprep.subr.mxu0 0.0
        %865 = vmatpush2.msra.mxu0 0.0
        %866 = vmatprep.mubr.f32.mxu0 0.0
        %867 = vmatmul.mubr.f32.gmra.mxu0 %v798
        %v868 = vpop.f32.mrf.mxu0
        %v869 = vadd.f32 0.0, %v868
        %v870 = vpop.f32.mrf.mxu0
        %871 = vmatprep.mubr.f32.mxu0 0.0
        %872 = vmatmul.mubr.f32.gmra.mxu0 %v800
        %v873 = vpop.f32.mrf.mxu0
        %v874 = vadd.f32 0.0, %v873
        %v875 = vpop.f32.mrf.mxu0
        %876 = vdwg.mxu0
        %v877 = vadd.f32 %v781, %v869
        %v878 = vadd.f32 %v782, %v874
        %v879 = vld [vmem:[%s2] sm:$0x1]
        %v881 = vlaneseq
        %v882 = vshrl.u32 %v881, 7
        %v883 = vsub.s32 0, %v882
        %v884 = vrot.slane %v879, %v883
        %v886 = vadd.f32 %v877, %v884
        %v887 = vadd.f32 %v878, %v884
        %v888 = vmax.f32 %v886, 0.0
        %v889 = vmax.f32 %v887, 0.0
        %890 = vst [vmem:[%s203] sm:$0xff] %v888
        %891 = vst [vmem:[%s203 + $0x8] sm:$0xff] %v889
        %s892 = sand.u32 %s97, 1
        %s893 = scalar_lea.sflag [#allocation4], %s892
        %s894 = sand.u32 %s97, 1
        %s895 = smul.addr %s894, 16
        %s896 = scalar_lea.vmem [#allocation7], %s895
        // Predicated region
        $region41: #{tpu_custom_call.1} parent=31 // pred_check
          %p897 = pneg %p107
        $region42: #{tpu_custom_call.1} parent=31 // pred_check_branch
          %899 = sbr.rel (%p897) target = $region44
        $region43: #{tpu_custom_call.1} parent=31 // pred_region
          %s901 = ssub.s32 256, 256
          %902 = vsyncadd %s893, %s901
          %s903 = smul.addr %s21, 2
          %s904 = smul.addr %s903, 128
          %s905 = scalar_lea.hbm %s3, %s904
          %s906 = sshll.u32 %s896, 4
          %s907 = int_to_ptr.vmem [resolvable:$true] %s906
          %912 = dma.vmem_to_hbm [thread:$0]  %s907, 256, %s905, %s893, 128, 128, 8
        $region44: #{tpu_custom_call.1} parent=31 // pred_fallthru
          _
      $region32: #{tpu_custom_call.1} parent=5 // pred_fallthru
        _
      %p913 = scmp.le.s32.totalorder 2, %s16
      // Predicated region
      $region45: #{tpu_custom_call.1} parent=5 // pred_check
        %p914 = pneg %p913
      $region46: #{tpu_custom_call.1} parent=5 // pred_check_branch
        %916 = sbr.rel (%p914) target = $region48
      $region47: #{tpu_custom_call.1} parent=5 // pred_region
        %s917 = ssub.s32 %s16, 2
        // Predicated region
        $region49: #{tpu_custom_call.1} parent=47 // pred_check
          %p918 = pneg %p113
        $region50: #{tpu_custom_call.1} parent=47 // pred_check_branch
          %920 = sbr.rel (%p918) target = $region52
        $region51: #{tpu_custom_call.1} parent=47 // pred_region
          %s921 = sand.u32 %s98, 1
          %s922 = scalar_lea.sflag [#allocation4], %s921
          %s923 = sand.u32 %s98, 1
          %s924 = smul.addr %s923, 16
          %s925 = scalar_lea.vmem [#allocation7], %s924
          %926 = dma.done %s922, 256
        $region52: #{tpu_custom_call.1} parent=47 // pred_fallthru
          _
      $region48: #{tpu_custom_call.1} parent=5 // pred_fallthru
        _
    $region6: #{tpu_custom_call.1} parent=1 // loop_footer
      %s20 = sadd.s32 1, %s16
    $region7: #{tpu_custom_call.1} parent=1 // loop_footer_branch
      %15 = sbr.rel target = $region3
    $region8: #{tpu_custom_call.1} parent=1 // loop_exit
      _
    %927 = vsyncpa [#allocation3], 1
    %s928 = scalar_lea.sflag [#allocation3], 1
    %929 = vsyncpa %s928, 1
    %930 = vsyncpa [#allocation6], 1
    %931 = vsyncpa [#allocation4], 1
    %s932 = scalar_lea.sflag [#allocation4], 1
    %933 = vsyncpa %s932, 1

</llo_original>
